<compile_context>
chip_gen: v5e
topology: v5e:2x2
jax: 0.10.0
libtpu: 0.0.40
codegen_flags: <defaults>
</compile_context>

<pallas_src>
import jax
import jax.numpy as jnp
from jax import lax
from jax.experimental import pallas as pl
from jax.experimental.pallas import tpu as pltpu


def _round_up(x, m):
    return (x + m - 1) // m * m


def _cdiv(a, b):
    return -(-a // b)


def _vmem_capacity_bytes(default=64 * 1024 * 1024):
    # Generation-aware VMEM capacity (v5e/v6e: 128 MiB, v7x: 64 MiB).
    # Fall back to the smallest (v7x) if the query is unavailable.
    try:
        info = pltpu.get_tpu_info()
        cap = int(getattr(info, "vmem_capacity_bytes", 0) or 0)
        if cap > 0:
            return cap
    except Exception:
        pass
    return default


# ----------------------------------------------------------------------------
# Kernels
# ----------------------------------------------------------------------------
def fce_prologue_kernel(x_ref, w_ref, shift_ref, z_ref):
    # x_ref:     (TB, Dinp)  concatenated [head_emb, rel_emb], zero-padded K
    # w_ref:     (Dinp, Dp)  fc1 weight^T with BN scale folded in (zero-padded)
    # shift_ref: (1, Dp)     b1*scale + beta - mean*scale (zero-padded)
    # z_ref:     (TB, Dp)    relu(bn(fc1(x)))  in the scoring dtype
    z = jnp.dot(x_ref[...], w_ref[...], preferred_element_type=jnp.float32)
    z = jnp.maximum(z + shift_ref[...], 0.0)
    z_ref[...] = z.astype(z_ref.dtype)


def fce_score_kernel(z_ref, e_ref, out_ref):
    # z_ref:   (TB, Dp)   post-prologue activations (bf16 or f32)
    # e_ref:   (TN, Dp)   entity-embedding tile, NATURAL layout (no transpose)
    # out_ref: (TB, TN)   sigmoid scores for this (batch, entity) tile
    s = lax.dot_general(z_ref[...], e_ref[...],
                        dimension_numbers=(((1,), (1,)), ((), ())),
                        preferred_element_type=jnp.float32)
    out_ref[...] = jax.nn.sigmoid(s).astype(out_ref.dtype)


# ----------------------------------------------------------------------------
# Planning / table preparation (hoistable out of the per-forward path)
# ----------------------------------------------------------------------------
def plan_scoring(num_ent, d_model, *, score_dtype=jnp.bfloat16,
                 out_dtype=jnp.bfloat16, tile_b_cap=256, max_tile_n=8192,
                 e_buffer_count=2):
    """Pick stage-2 tile sizes from a generation-aware VMEM budget."""
    score_dtype = jnp.dtype(score_dtype)
    out_dtype = jnp.dtype(out_dtype)
    e_bytes = score_dtype.itemsize
    o_bytes = out_dtype.itemsize
    Dp = _round_up(max(d_model, 1), 128)          # lane-dense contraction dim

    cap = _vmem_capacity_bytes()
    budget = cap // 2                              # tile-sizing budget
    e_bufs = max(2, int(e_buffer_count))

    # Largest lane-dense entity tile whose pipeline buffers (E, z, out) fit.
    z_term = 2 * tile_b_cap * Dp * e_bytes
    denom = e_bufs * Dp * e_bytes + 2 * tile_b_cap * o_bytes
    tile_n = max(128, ((budget - z_term) // denom) // 128 * 128)
    tile_n = min(tile_n, max_tile_n, _round_up(num_ent, 128))

    # Minimize entity padding at the chosen step count; keep the number of
    # entity tiles even (>=2) so the megacore split stays balanced on v7x.
    n_steps = _cdiv(num_ent, tile_n)
    if n_steps > 1 and n_steps % 2 == 1:
        n_steps += 1
    tile_n = _round_up(_cdiv(num_ent, n_steps), 128)
    Np = tile_n * n_steps

    footprint = (e_bufs * tile_n * Dp * e_bytes
                 + 2 * tile_b_cap * Dp * e_bytes
                 + 2 * tile_b_cap * tile_n * o_bytes)
    vmem_limit = min(int(cap * 0.85),
                     max(footprint + (16 << 20), 32 << 20))

    return dict(Dp=Dp, tile_n=tile_n, Np=Np, n_ent_tiles=n_steps,
                tile_b_cap=tile_b_cap, e_buffer_count=e_bufs,
                vmem_limit=int(vmem_limit),
                score_dtype=score_dtype, out_dtype=out_dtype)


def prepare_entity_table(ent_emb, plan):
    """Cast + pad the entity table for scoring ONCE (hoist out of the
    per-forward path; a full-table read+write should not be paid per call)."""
    num_ent, D = ent_emb.shape
    e = ent_emb.astype(plan["score_dtype"])
    Np, Dp = plan["Np"], plan["Dp"]
    if (Np, Dp) != (num_ent, D):
        e = jnp.pad(e, ((0, Np - num_ent), (0, Dp - D)))
    return e


def _e_block_spec(shape, index_map, buffer_count):
    # Optional 3-deep E pipelining (worth trying on v7x, where per-step DMA
    # time is short enough that issue latency is exposed).  Default 2.
    if buffer_count > 2:
        try:
            return pl.BlockSpec(shape, index_map,
                                pipeline_mode=pl.Buffered(buffer_count))
        except Exception:
            pass
    return pl.BlockSpec(shape, index_map)


# ----------------------------------------------------------------------------
# Forward
# ----------------------------------------------------------------------------
def fce_forward(h_idx, r_idx, ent_emb, rel_emb, w1, b1,
                bn_gamma, bn_beta, bn_mean, bn_var, bn_eps=1e-5,
                score_dtype=jnp.bfloat16, out_dtype=jnp.bfloat16,
                tile_b=256, plan=None, e_score=None, e_buffer_count=2):
    """FCE forward.  Embedding gathers / parameter folding are glue; the
    fused Linear->BN->ReLU prologue and the 1-to-N scoring matmul run in
    Pallas.  Scores are returned in `out_dtype` (bf16 by default -- halves
    the dominant HBM write stream; upcast downstream if needed)."""
    B = h_idx.shape[0]
    num_ent, D = ent_emb.shape
    Dr = rel_emb.shape[1]
    Din = D + Dr

    if plan is None:
        plan = plan_scoring(num_ent, D, score_dtype=score_dtype,
                            out_dtype=out_dtype, tile_b_cap=tile_b,
                            e_buffer_count=e_buffer_count)
    score_dtype = plan["score_dtype"]
    out_dtype = plan["out_dtype"]
    if e_score is None:
        e_score = prepare_entity_table(ent_emb, plan)

    Dp, tile_n, Np = plan["Dp"], plan["tile_n"], plan["Np"]
    Dinp = _round_up(Din, 128)

    # ---- glue: gathers + concat + BN/bias folding (O(B*Din) + O(Din*D)) ----
    h_e = jnp.take(ent_emb, h_idx, axis=0)                       # (B, D)
    r_e = jnp.take(rel_emb, r_idx, axis=0)                       # (B, Dr)
    x = jnp.concatenate([h_e, r_e], axis=1).astype(jnp.float32)  # (B, Din)

    scale = bn_gamma / jnp.sqrt(bn_var + bn_eps)                 # (D,)
    w1s = (w1.T * scale[None, :]).astype(jnp.float32)            # (Din, D)
    shift = (b1 * scale + bn_beta - bn_mean * scale)
    shift = shift.reshape(1, D).astype(jnp.float32)

    # ---- batch tiling + zero padding (lane/sublane aligned) ----------------
    tile_b = min(plan["tile_b_cap"], _round_up(B, 16))
    Bp = _round_up(B, tile_b)

    if (Bp, Dinp) != (B, Din):
        x = jnp.pad(x, ((0, Bp - B), (0, Dinp - Din)))
    if (Dinp, Dp) != (Din, D):
        w1s = jnp.pad(w1s, ((0, Dinp - Din), (0, Dp - D)))
        shift = jnp.pad(shift, ((0, 0), (0, Dp - D)))

    # ---- stage 1: fused fc1 + BN(folded) + ReLU, computed once -------------
    z = pl.pallas_call(
        fce_prologue_kernel,
        out_shape=jax.ShapeDtypeStruct((Bp, Dp), score_dtype),
        grid_spec=pltpu.PrefetchScalarGridSpec(
            num_scalar_prefetch=0,
            grid=(Bp // tile_b,),
            in_specs=[
                pl.BlockSpec((tile_b, Dinp), lambda i: (i, 0)),   # x
                pl.BlockSpec((Dinp, Dp), lambda i: (0, 0)),       # fc1^T*scale
                pl.BlockSpec((1, Dp), lambda i: (0, 0)),          # shift
            ],
            out_specs=pl.BlockSpec((tile_b, Dp), lambda i: (i, 0)),
        ),
        compiler_params=pltpu.CompilerParams(
            dimension_semantics=("parallel",),
            vmem_limit_bytes=32 * 1024 * 1024),
    )(x, w1s, shift)

    # ---- stage 2: sigmoid(z @ E^T) ------------------------------------------
    # Grid = (entity, batch); batch is the FAST axis so the E block index is
    # invariant along it and each E tile is streamed from HBM exactly once.
    out = pl.pallas_call(
        fce_score_kernel,
        out_shape=jax.ShapeDtypeStruct((Bp, Np), out_dtype),
        grid_spec=pltpu.PrefetchScalarGridSpec(
            num_scalar_prefetch=0,
            grid=(Np // tile_n, Bp // tile_b),
            in_specs=[
                pl.BlockSpec((tile_b, Dp), lambda j, i: (i, 0)),  # z (tiny refetch)
                _e_block_spec((tile_n, Dp), lambda j, i: (j, 0),
                              plan["e_buffer_count"]),            # E tile
            ],
            out_specs=pl.BlockSpec((tile_b, tile_n), lambda j, i: (i, j)),
        ),
        compiler_params=pltpu.CompilerParams(
            dimension_semantics=("parallel", "parallel"),
            vmem_limit_bytes=plan["vmem_limit"]),
    )(z, e_score)

    return out[:B, :num_ent]


# ----------------------------------------------------------------------------
# Pure-JAX reference
# ----------------------------------------------------------------------------
def fce_reference(h_idx, r_idx, ent_emb, rel_emb, w1, b1,
                  bn_gamma, bn_beta, bn_mean, bn_var, bn_eps=1e-5):
    h_e = jnp.take(ent_emb, h_idx, axis=0)
    r_e = jnp.take(rel_emb, r_idx, axis=0)
    x = jnp.concatenate([h_e, r_e], axis=1)
    x = x @ w1.T + b1
    x = (x - bn_mean) / jnp.sqrt(bn_var + bn_eps) * bn_gamma + bn_beta
    x = jnp.maximum(x, 0.0)
    scores = x @ ent_emb.T
    return jax.nn.sigmoid(scores)


if __name__ == "__main__":
    # Small deterministic config consistent with the module's __init__.
    B = 8            # batch
    num_ent = 256    # ent_vocab_size
    num_rel = 8      # rel_vocab_size
    D = 32           # embedding_dim
    Dr = 32          # rel_embedding_dim

    key = jax.random.PRNGKey(0)
    ks = jax.random.split(key, 8)

    ent_emb = jax.random.normal(ks[0], (num_ent, D), jnp.float32) * 0.1
    rel_emb = jax.random.normal(ks[1], (num_rel, Dr), jnp.float32) * 0.1
    w1 = jax.random.normal(ks[2], (D, D + Dr), jnp.float32) * 0.1  # Linear(out=D, in=D+Dr)
    b1 = jax.random.normal(ks[3], (D,), jnp.float32) * 0.01
    bn_gamma = jnp.ones((D,), jnp.float32)
    bn_beta = jnp.zeros((D,), jnp.float32)
    bn_mean = jax.random.normal(ks[4], (D,), jnp.float32) * 0.01
    bn_var = jnp.abs(jax.random.normal(ks[5], (D,), jnp.float32)) + 1.0

    h_idx = jax.random.randint(ks[6], (B,), 0, num_ent)
    r_idx = jax.random.randint(ks[7], (B,), 0, num_rel)

    ref = fce_reference(h_idx, r_idx, ent_emb, rel_emb, w1, b1,
                        bn_gamma, bn_beta, bn_mean, bn_var)

    # Default path: bf16 streaming of E, bf16 score writeback (bandwidth-
    # optimal).  Entity table prepared ONCE and passed in (hoisted prep).
    plan = plan_scoring(num_ent, D, score_dtype=jnp.bfloat16,
                        out_dtype=jnp.bfloat16)
    e_table = prepare_entity_table(ent_emb, plan)
    pred = fce_forward(h_idx, r_idx, ent_emb, rel_emb, w1, b1,
                       bn_gamma, bn_beta, bn_mean, bn_var,
                       plan=plan, e_score=e_table)
    pred = jax.block_until_ready(pred)
    assert pred.shape == (B, num_ent)
    # bf16 activations + bf16 output quantization: sigmoid outputs agree to
    # well under 2e-2 (large-|logit| saturation is fine for BCE-style scores).
    assert jnp.allclose(pred.astype(jnp.float32), ref, atol=2e-2, rtol=2e-2), \
        f"bf16 path max abs err {jnp.max(jnp.abs(pred.astype(jnp.float32) - ref))}"

    # f32 scoring path (tight structural check of the BN folding / padding).
    pred_f32 = fce_forward(h_idx, r_idx, ent_emb, rel_emb, w1, b1,
                           bn_gamma, bn_beta, bn_mean, bn_var,
                           score_dtype=jnp.float32, out_dtype=jnp.float32)
    pred_f32 = jax.block_until_ready(pred_f32)
    assert jnp.allclose(pred_f32, ref, atol=1e-4, rtol=1e-4), \
        f"f32 path max abs err {jnp.max(jnp.abs(pred_f32 - ref))}"

    print("KERNEL_OK")
</pallas_src>

<mosaic_0001>
module attributes {stable_mosaic.version = 11 : i64} {
  func.func @fce_prologue_kernel(%arg0: i32, %arg1: memref<16x128xf32, #tpu.memory_space<vmem>>, %arg2: memref<128x128xf32, #tpu.memory_space<vmem>>, %arg3: memref<1x128xf32, #tpu.memory_space<vmem>>, %arg4: memref<16x128xbf16, #tpu.memory_space<vmem>>) attributes {dimension_semantics = [#tpu.dimension_semantics<parallel>], iteration_bounds = array<i64: 1>, scalar_prefetch = 0 : i64, scratch_operands = 0 : i64, tpu.core_type = #tpu.core_type<tc>, window_params = [{transform_indices = @transform_0, window_bounds = array<i64: 16, 128>}, {pipeline_mode = #tpu.pipeline_mode<synchronous>, transform_indices = @transform_1, window_bounds = array<i64: 128, 128>}, {pipeline_mode = #tpu.pipeline_mode<synchronous>, transform_indices = @transform_2, window_bounds = array<i64: 1, 128>}, {transform_indices = @transform_3, window_bounds = array<i64: 16, 128>}]} {
    %c0 = arith.constant 0 : index
    %c0_0 = arith.constant 0 : index
    %0 = vector.load %arg1[%c0, %c0_0] : memref<16x128xf32, #tpu.memory_space<vmem>>, vector<16x128xf32>
    %c0_1 = arith.constant 0 : index
    %c0_2 = arith.constant 0 : index
    %1 = vector.load %arg2[%c0_1, %c0_2] : memref<128x128xf32, #tpu.memory_space<vmem>>, vector<128x128xf32>
    %cst = arith.constant dense<0.000000e+00> : vector<16x128xf32>
    %2 = tpu.matmul %0, %1, %cst {dimension_numbers = #tpu.dot_dimension_numbers<[1], [0], [0], [1], [0, 0, 1, 1], [], []>} : vector<16x128xf32>, vector<128x128xf32>, vector<16x128xf32> -> vector<16x128xf32>
    %c0_3 = arith.constant 0 : index
    %c0_4 = arith.constant 0 : index
    %3 = vector.load %arg3[%c0_3, %c0_4] : memref<1x128xf32, #tpu.memory_space<vmem>>, vector<1x128xf32>
    %4 = vector.broadcast %3 : vector<1x128xf32> to vector<16x128xf32>
    %5 = arith.addf %2, %4 : vector<16x128xf32>
    %cst_5 = arith.constant 0.000000e+00 : f32
    %6 = vector.broadcast %cst_5 : f32 to vector<16x128xf32>
    %7 = arith.maximumf %5, %6 : vector<16x128xf32>
    %8 = arith.truncf %7 : vector<16x128xf32> to vector<16x128xbf16>
    %c0_6 = arith.constant 0 : index
    %c0_7 = arith.constant 0 : index
    %9 = vector.load %arg4[%c0_6, %c0_7] : memref<16x128xbf16, #tpu.memory_space<vmem>>, vector<16x128xbf16>
    tpu.vector_store %arg4[%c0_6, %c0_7], %8 {strides = array<i32>} : memref<16x128xbf16, #tpu.memory_space<vmem>>, vector<16x128xbf16>,
    return
  }
  func.func @transform_0(%arg0: i32) -> (i32, i32) {
    %c0_i32 = arith.constant 0 : i32
    %c0_i32_0 = arith.constant 0 : i32
    return %arg0, %c0_i32 : i32, i32
  }
  func.func @transform_1(%arg0: i32) -> (i32, i32) {
    %c0_i32 = arith.constant 0 : i32
    %c0_i32_0 = arith.constant 0 : i32
    %c0_i32_1 = arith.constant 0 : i32
    return %c0_i32, %c0_i32_0 : i32, i32
  }
  func.func @transform_2(%arg0: i32) -> (i32, i32) {
    %c0_i32 = arith.constant 0 : i32
    %c0_i32_0 = arith.constant 0 : i32
    %c0_i32_1 = arith.constant 0 : i32
    return %c0_i32, %c0_i32_0 : i32, i32
  }
  func.func @transform_3(%arg0: i32) -> (i32, i32) {
    %c0_i32 = arith.constant 0 : i32
    %c0_i32_0 = arith.constant 0 : i32
    return %arg0, %c0_i32 : i32, i32
  }
}

</mosaic_0001>

<llo_original>
// kernel: tpu_custom_call.1
$region0: #{tpu_custom_call.1}
  #allocation0 [shape = 'u32[]', space=smem, size = 0x4, offset = 0x4, fixed_abs, tag = 'smem constant byte address 0x4 - core index']
  #allocation1 [shape = 'u32[72,128]{1,0:T(1,128)}', space=vmem, size = 0x9000, scoped, tag = 'internal scratch']
  %s0 = inlined_call_operand.hbm [shape: f32[16,128], index: 0, kind: input, shape index: {}]
  %s1 = inlined_call_operand.hbm [shape: f32[128,128], index: 1, kind: input, shape index: {}]
  %s2 = inlined_call_operand.vmem [shape: f32[1,128], index: 2, kind: input, shape index: {}]
  %s3 = inlined_call_operand.hbm [shape: bf16[16,128], index: 3, kind: output, shape index: {}]
  %s4 = sld [smem:[#allocation0]]
  $region30: #{tpu_custom_call.1} parent=0
    _
  %s6 = ssub.s32 1, %s4
  %s7 = scalar_select 0, %s6, %s4
  $region1: #{tpu_custom_call.1} parent=0
    #allocation2 [shape = 'u8[8192]{0}', space=vmem, size = 0x2000, scoped, tag = 'input window, operand 0, single buffered']
    #allocation3 [shape = 's32[1]{0}', space=sflag, size = 0x4, scoped, tag = 'scoped memory for tpu_custom_call.1']
    #allocation4 [shape = 's32[1]{0}', space=sflag, size = 0x4, scoped, tag = 'scoped memory for tpu_custom_call.1']
    #allocation5 [shape = 'u8[65536]{0}', space=vmem, size = 0x10000, scoped, tag = 'input window, operand 1, single buffered']
    #allocation6 [shape = 's32[1]{0}', space=sflag, size = 0x4, scoped, tag = 'scoped memory for tpu_custom_call.1']
    #allocation7 [shape = 'u8[4096]{0}', space=vmem, size = 0x1000, scoped, tag = 'output window, operand 0, single buffered']
    %8 = vsyncpa [#allocation3], 0
    %9 = vsyncpa [#allocation6], 0
    %10 = vsyncpa [#allocation4], 0
    // Predicated region
    $region2: #{tpu_custom_call.1} parent=1 // pred_check
      _
    $region3: #{tpu_custom_call.1} parent=1 // pred_check_branch
      %12 = sbr.rel (0) target = $region5
    $region4: #{tpu_custom_call.1} parent=1 // pred_region
      %14 = vsyncadd [#allocation3], 0
      %s15 = sshll.u32 %s0, 4
      %s16 = int_to_ptr.hbm [resolvable:$true] %s15
      %s17 = sshll.u32 [#allocation2], 4
      %s18 = int_to_ptr.vmem [resolvable:$true] %s17
      %23 = dma.hbm_to_vmem [thread:$0]  %s16, 256, %s18, [#allocation3], 128, 128, 8
    $region5: #{tpu_custom_call.1} parent=1 // pred_fallthru
      _
    // Predicated region
    $region6: #{tpu_custom_call.1} parent=1 // pred_check
      _
    $region7: #{tpu_custom_call.1} parent=1 // pred_check_branch
      %25 = sbr.rel (0) target = $region9
    $region8: #{tpu_custom_call.1} parent=1 // pred_region
      %27 = vsyncadd [#allocation6], 0
      %s28 = sshll.u32 %s1, 4
      %s29 = int_to_ptr.hbm [resolvable:$true] %s28
      %s30 = sshll.u32 [#allocation5], 4
      %s31 = int_to_ptr.vmem [resolvable:$true] %s30
      %36 = dma.hbm_to_vmem [thread:$0]  %s29, 2048, %s31, [#allocation6], 128, 128, 8
    $region9: #{tpu_custom_call.1} parent=1 // pred_fallthru
      _
    // Predicated region
    $region10: #{tpu_custom_call.1} parent=1 // pred_check
      _
    $region11: #{tpu_custom_call.1} parent=1 // pred_check_branch
      %38 = sbr.rel (0) target = $region13
    $region12: #{tpu_custom_call.1} parent=1 // pred_region
      _
    $region13: #{tpu_custom_call.1} parent=1 // pred_fallthru
      _
    // Predicated region
    $region14: #{tpu_custom_call.1} parent=1 // pred_check
      _
    $region15: #{tpu_custom_call.1} parent=1 // pred_check_branch
      %40 = sbr.rel (0) target = $region17
    $region16: #{tpu_custom_call.1} parent=1 // pred_region
      %42 = dma.done [#allocation3], 256
    $region17: #{tpu_custom_call.1} parent=1 // pred_fallthru
      _
    // Predicated region
    $region18: #{tpu_custom_call.1} parent=1 // pred_check
      _
    $region19: #{tpu_custom_call.1} parent=1 // pred_check_branch
      %44 = sbr.rel (0) target = $region21
    $region20: #{tpu_custom_call.1} parent=1 // pred_region
      %46 = dma.done [#allocation6], 2048
    $region21: #{tpu_custom_call.1} parent=1 // pred_fallthru
      _
    %v47 = vld [vmem:[#allocation2] sm:$0xff]
    %v48 = vld [vmem:[#allocation2 + $0x8] sm:$0xff]
    %v49 = vld [vmem:[#allocation5] sm:$0xff]
    %v50 = vld [vmem:[#allocation5 + $0x8] sm:$0xff]
    %v51 = vld [vmem:[#allocation5 + $0x10] sm:$0xff]
    %v52 = vld [vmem:[#allocation5 + $0x18] sm:$0xff]
    %v53 = vld [vmem:[#allocation5 + $0x20] sm:$0xff]
    %v54 = vld [vmem:[#allocation5 + $0x28] sm:$0xff]
    %v55 = vld [vmem:[#allocation5 + $0x30] sm:$0xff]
    %v56 = vld [vmem:[#allocation5 + $0x38] sm:$0xff]
    %v57 = vld [vmem:[#allocation5 + $0x40] sm:$0xff]
    %v58 = vld [vmem:[#allocation5 + $0x48] sm:$0xff]
    %v59 = vld [vmem:[#allocation5 + $0x50] sm:$0xff]
    %v60 = vld [vmem:[#allocation5 + $0x58] sm:$0xff]
    %v61 = vld [vmem:[#allocation5 + $0x60] sm:$0xff]
    %v62 = vld [vmem:[#allocation5 + $0x68] sm:$0xff]
    %v63 = vld [vmem:[#allocation5 + $0x70] sm:$0xff]
    %v64 = vld [vmem:[#allocation5 + $0x78] sm:$0xff]
    %v65 = vld [vmem:[%s2] sm:$0x1]
    %v67 = vperm.slane %v65, 0
    %69 = vmatpush.msra.mxu0 %v64
    %70 = vmatpush.msra.mxu0 %v63
    %71 = vmatpush.msra.mxu0 %v62
    %72 = vmatpush.msra.mxu0 %v61
    %73 = vmatpush.msra.mxu0 %v60
    %74 = vmatpush.msra.mxu0 %v59
    %75 = vmatpush.msra.mxu0 %v58
    %76 = vmatpush.msra.mxu0 %v57
    %77 = vmatpush.msra.mxu0 %v56
    %78 = vmatpush.msra.mxu0 %v55
    %79 = vmatpush.msra.mxu0 %v54
    %80 = vmatpush.msra.mxu0 %v53
    %81 = vmatpush.msra.mxu0 %v52
    %82 = vmatpush.msra.mxu0 %v51
    %83 = vmatpush.msra.mxu0 %v50
    %84 = vmatpush.msra.mxu0 %v49
    %85 = vmatmul.f32.gmra.mxu0 %v47
    %v86 = vpop.f32.mrf.mxu0
    %v87 = vadd.f32 %v67, %v86
    %88 = vmatmul.f32.gmra.mxu0 %v48
    %v89 = vpop.f32.mrf.mxu0
    %v90 = vadd.f32 %v67, %v89
    %91 = vdwg.mxu0
    %v92 = vmax.f32 %v87, 0.0
    %v93 = vmax.f32 %v90, 0.0
    %v94 = vpack.c.bf16 %v92, %v92
    %v95 = vpack.c.bf16 %v93, %v93
    %96 = vst [vmem:[#allocation7] sm:$0xf] %v94
    %97 = vst [vmem:[#allocation7 + $0x4] sm:$0xf] %v95
    // Predicated region
    $region22: #{tpu_custom_call.1} parent=1 // pred_check
      _
    $region23: #{tpu_custom_call.1} parent=1 // pred_check_branch
      %99 = sbr.rel (0) target = $region25
    $region24: #{tpu_custom_call.1} parent=1 // pred_region
      %101 = vsyncadd [#allocation4], 0
      %s102 = sshll.u32 [#allocation7], 4
      %s103 = int_to_ptr.vmem [resolvable:$true] %s102
      %s104 = sshll.u32 %s3, 4
      %s105 = int_to_ptr.hbm [resolvable:$true] %s104
      %110 = dma.vmem_to_hbm [thread:$0]  %s103, 128, %s105, [#allocation4], 64, 64, 4
    $region25: #{tpu_custom_call.1} parent=1 // pred_fallthru
      _
    // Predicated region
    $region26: #{tpu_custom_call.1} parent=1 // pred_check
      _
    $region27: #{tpu_custom_call.1} parent=1 // pred_check_branch
      %112 = sbr.rel (0) target = $region29
    $region28: #{tpu_custom_call.1} parent=1 // pred_region
      %114 = dma.done [#allocation4], 128
    $region29: #{tpu_custom_call.1} parent=1 // pred_fallthru
      _
    %115 = vsyncpa [#allocation3], 1
    %116 = vsyncpa [#allocation6], 1
    %117 = vsyncpa [#allocation4], 1

</llo_original>
